<compile_context>
chip_gen: v6e
topology: v6e:2x2x1
jax: 0.10.0
libtpu: 0.0.40
codegen_flags: <defaults>
</compile_context>

<pallas_src>
import jax
import jax.numpy as jnp
from jax.experimental import pallas as pl
from jax.experimental.pallas import tpu as pltpu


def _hbm_to_hbm_copy_kernel(x_hbm_ref, o_hbm_ref, sem):
    # Single direct HBM->HBM DMA.  No VMEM staging, no vreg traffic.
    cp = pltpu.make_async_copy(x_hbm_ref, o_hbm_ref, sem)
    cp.start()
    cp.wait()


def m_forward(x291, x289, *, use_pallas_copy=False):
    """Semantics of M.forward:
         x292 = operator.add(x291, (4, 64))   # target view shape
         return x289.view(x292)

    x291: python tuple (B, S); x289: jnp array [B, S, H] with H == 4*64.

    use_pallas_copy=False (default, recommended): zero-cost metadata reshape.
    use_pallas_copy=True: route the bytes through one HBM->HBM DMA Pallas kernel
    (only useful if a materialized copy is genuinely required), then apply the
    free reshape outside the kernel.
    """
    x292 = tuple(x291) + (4, 64)
    b, s, h = x289.shape
    nh, hd = x292[-2], x292[-1]
    assert x292[:2] == (b, s) and nh * hd == h, "view shape mismatch"

    if use_pallas_copy:
        # Drop the size-1 batch dim: a 2-D (S, H) = (384, 256) slab maps cleanly
        # onto (8, 128) vregs / DMA descriptors with no 3-D bookkeeping.
        x2d = jnp.reshape(x289, (b * s, h))
        nbytes = x2d.size * x2d.dtype.itemsize
        y2d = pl.pallas_call(
            _hbm_to_hbm_copy_kernel,
            out_shape=jax.ShapeDtypeStruct((b * s, h), x289.dtype),
            in_specs=[pl.BlockSpec(memory_space=pl.ANY)],
            out_specs=pl.BlockSpec(memory_space=pl.ANY),
            scratch_shapes=[pltpu.SemaphoreType.DMA(())],
            cost_estimate=pl.CostEstimate(
                flops=0, transcendentals=0, bytes_accessed=2 * nbytes
            ),
        )(x2d)
        y = y2d
    else:
        # TODO(synk): pure view — no kernel needed; fold the (4,64) head split into
        # the downstream attention/projection kernel's BlockSpec instead.
        y = x289

    # Contiguous last-dim split: metadata-only, free.
    return jnp.reshape(y, x292)


if __name__ == "__main__":
    key = jax.random.PRNGKey(0)
    x289 = jax.random.normal(key, (1, 384, 256), dtype=jnp.float32)
    x291 = (1, 384)

    # Reference semantics of torch .view on a contiguous tensor.
    ref = jnp.reshape(x289, (1, 384, 4, 64))

    # Fast (default) path: no kernel, metadata reshape only.
    y_fast = m_forward(x291, x289)
    jax.block_until_ready(y_fast)

    # Pallas path: one HBM->HBM DMA copy kernel, reshape outside.
    y_pallas = m_forward(x291, x289, use_pallas_copy=True)
    jax.block_until_ready(y_pallas)

    assert y_fast.shape == (1, 384, 4, 64) and y_fast.dtype == x289.dtype
    assert y_pallas.shape == (1, 384, 4, 64) and y_pallas.dtype == x289.dtype
    assert bool(jnp.all(y_fast == ref))
    assert bool(jnp.all(y_pallas == ref))

    print("KERNEL_OK")
</pallas_src>

<mosaic_0001>
module attributes {stable_mosaic.version = 11 : i64} {
  func.func @_hbm_to_hbm_copy_kernel(%arg0: memref<384x256xf32, #tpu.memory_space<any>>, %arg1: memref<384x256xf32, #tpu.memory_space<any>>, %arg2: memref<!tpu.dma_semaphore, #tpu.memory_space<semaphore_mem>>) attributes {dimension_semantics = [], scalar_prefetch = 0 : i64, scratch_operands = 1 : i64, tpu.core_type = #tpu.core_type<tc>} {
    tpu.enqueue_dma source(%arg0 : memref<384x256xf32, #tpu.memory_space<any>>) target(%arg1 : memref<384x256xf32, #tpu.memory_space<any>>) target_semaphore(%arg2 : memref<!tpu.dma_semaphore, #tpu.memory_space<semaphore_mem>>)
    tpu.wait_dma2 semaphore(%arg2 : memref<!tpu.dma_semaphore, #tpu.memory_space<semaphore_mem>>) src(%arg0 : memref<384x256xf32, #tpu.memory_space<any>>) dst(%arg1 : memref<384x256xf32, #tpu.memory_space<any>>)
    return
  }
}

</mosaic_0001>

<llo_original>
// kernel: tpu_custom_call.1
$region0: #{tpu_custom_call.1}
  #allocation0 [shape = 'u32[]', space=smem, size = 0x4, offset = 0x4, fixed_abs, tag = 'smem constant byte address 0x4 - core index']
  #allocation1 [shape = 'u32[144,128]{1,0:T(1,128)}', space=vmem, size = 0x12000, scoped, tag = 'internal scratch']
  #allocation2 [shape = 's32[1]{0}', space=sflag, size = 0x4, scoped, tag = 'scratch operand']
  #allocation3 [shape = 's32[]', space=sflag, size = 0x4, offset = 0, fixed_abs, tag = 'sflag constant byte address 0x0 - dummy sync flag']
  #allocation4 [shape = 'u32[0]{0}', space=smem, size = 0, offset = 0, fixed_abs, tag = 'smem constant byte address 0x0 - null']
  %s0 = inlined_call_operand.hbm [shape: f32[384,256], index: 0, kind: input, shape index: {}]
  %s1 = inlined_call_operand.hbm [shape: f32[384,256], index: 1, kind: output, shape index: {}]
  %s2 = sld [smem:[#allocation0]]
  $region2: #{tpu_custom_call.1} parent=0
    _
  %s4 = ssub.s32 1, %s2
  %s5 = scalar_select 0, %s4, %s2
  %s7 = sshll.u32 1, 14
  %s8 = sxor.u32 4294967295, %s7
  %12 = dma.general %s0, 12288, %s1, [#allocation2], 131072, [#allocation4], 0, 0
  %s13 = smul.u32 8, 48
  %s14 = smul.u32 %s13, 2
  %s15 = sshll.u32 %s14, 4
  %16 = dma.done [#allocation2], %s15
  %17 = vsyncmov [#allocation2]
  %s18 = vpop.sfrf %17
  %p19 = scmp.eq.s32.totalorder %s18, 0
  %p20 = pneg %p19
  %22 = shalt.err (%p20)

</llo_original>
